<compile_context>
chip_gen: v7x
topology: tpu7x:2x2x1
jax: 0.10.0
libtpu: 0.0.40
codegen_flags: <defaults>
</compile_context>

<pallas_src>
import functools
import math

import jax
import jax.numpy as jnp
from jax.experimental import pallas as pl
from jax.experimental.pallas import tpu as pltpu


_FAST_PATH_BYTES = 10 * 1024 * 1024     # single-kernel path when slab fits VMEM
_TILE_VMEM_BUDGET = 12 * 1024 * 1024    # per-step working set cap (v7x-safe)
_VMEM_LIMIT = 32 * 1024 * 1024          # scoped-VMEM request (<= v7x physical)


def _cdiv(a, b):
    return -(-a // b)


def _round_up(a, b):
    return _cdiv(a, b) * b


# ---------------------------------------------------------------------------
# FAST PATH: conv + BN (centered batch stats) + ReLU in one kernel
# ---------------------------------------------------------------------------
def _fused_small_kernel(x_ref, w_ref, g_ref, b_ref, o_ref, y_ref, *,
                        n_batch, bn_single, eps, cdt):
    # x_ref: (B, C, L)   w_ref: (Co, C) [compute dtype]
    # g_ref/b_ref: (Co,1) or (1,1) f32   o_ref: (B, Co, L)   y_ref: (B, Co, L) f32
    w = w_ref[...]
    co = w_ref.shape[0]
    l = x_ref.shape[-1]
    n = n_batch * l

    # pass A: conv (MXU) into resident VMEM scratch + per-channel sums
    sum_acc = jnp.zeros((co, 1), jnp.float32)
    for b in range(n_batch):
        yb = jnp.dot(w, x_ref[b].astype(cdt),
                     preferred_element_type=jnp.float32)
        y_ref[b] = yb
        sum_acc = sum_acc + jnp.sum(yb, axis=1, keepdims=True)

    if bn_single:
        mean = (jnp.sum(sum_acc) / (n * co)).reshape(1, 1)
    else:
        mean = sum_acc / n                                  # (Co, 1)

    # pass B: centered variance (numerically robust)
    var_acc = jnp.zeros((co, 1), jnp.float32)
    for b in range(n_batch):
        d = y_ref[b] - mean
        var_acc = var_acc + jnp.sum(d * d, axis=1, keepdims=True)

    if bn_single:
        var = (jnp.sum(var_acc) / (n * co)).reshape(1, 1)
    else:
        var = var_acc / n

    scale = g_ref[...] * jax.lax.rsqrt(var + eps)
    bias = b_ref[...] - mean * scale

    # pass C: normalize + ReLU
    for b in range(n_batch):
        o_ref[b] = jnp.maximum(y_ref[b] * scale + bias, 0.0).astype(o_ref.dtype)


# ---------------------------------------------------------------------------
# TILED PATH, pass 1: accumulate X statistics (sum_x and Gram = X X^T)
# ---------------------------------------------------------------------------
def _x_stats_kernel(x_ref, sum_ref, gram_ref, *,
                    cdt, l_total, tile_l, n_inner, needs_mask):
    # x_ref: (C, tile_l)   sum_ref: (C, 1)   gram_ref: (C, C)  [f32 accumulators]
    i = pl.program_id(2)

    @pl.when(i == 0)
    def _():
        sum_ref[...] = jnp.zeros_like(sum_ref)
        gram_ref[...] = jnp.zeros_like(gram_ref)

    x = x_ref[...].astype(cdt)
    if needs_mask:
        # Ragged last tile and/or duplicated (clamped) tile: zero the columns
        # whose *intended* global index is out of range so they contribute 0.
        o = pl.program_id(1)
        start = (o * n_inner + i) * tile_l
        col = jax.lax.broadcasted_iota(jnp.int32, x.shape, 1) + start
        x = jnp.where(col < l_total, x, jnp.zeros_like(x))

    ones = jnp.ones((x.shape[1], 1), x.dtype)
    sum_ref[...] += jnp.dot(x, ones, preferred_element_type=jnp.float32)
    gram_ref[...] += jax.lax.dot_general(
        x, x, (((1,), (1,)), ((), ())), preferred_element_type=jnp.float32)


# ---------------------------------------------------------------------------
# TILED PATH, pass 2: conv (matmul) + fused BN affine + ReLU
# ---------------------------------------------------------------------------
def _conv_bn_relu_kernel(x_ref, w_ref, scale_ref, bias_ref, o_ref, *, cdt):
    # x_ref: (C, tile_l)  w_ref: (Co, C)  scale/bias: (Co, 1)  o_ref: (Co, tile_l)
    y = jnp.dot(w_ref[...], x_ref[...].astype(cdt),
                preferred_element_type=jnp.float32)
    y = y * scale_ref[...] + bias_ref[...]
    o_ref[...] = jnp.maximum(y, 0.0).astype(o_ref.dtype)


# ---------------------------------------------------------------------------
# Finalize for the tiled path: per-channel conv stats from X stats, fold BN
# ---------------------------------------------------------------------------
def _finalize_scale_bias(sum_part, gram_part, w, gamma, beta, n, bn_single, eps):
    sum_x = jnp.sum(sum_part, axis=(0, 1))[:, 0]           # (C,)
    gram = jnp.sum(gram_part, axis=(0, 1))                 # (C, C)
    wf = w.astype(jnp.float32)
    co = wf.shape[0]
    s = wf @ sum_x                                          # per-channel sum(y)
    q = jnp.einsum("oc,cd,od->o", wf, gram, wf)             # per-channel sum(y^2)
    # TODO(synk): E[y^2]-E[y]^2 in f32 can cancel for very large means; the
    # fast path uses a centered variance instead.
    if bn_single:
        mean = jnp.sum(s) / (n * co)
        var = jnp.maximum(jnp.sum(q) / (n * co) - mean * mean, 0.0)
        sc = gamma.reshape(()) * jax.lax.rsqrt(var + eps)
        bi = beta.reshape(()) - mean * sc
        scale = jnp.full((co, 1), sc, jnp.float32)
        bias = jnp.full((co, 1), bi, jnp.float32)
    else:
        mean = s / n
        var = jnp.maximum(q / n - mean * mean, 0.0)
        sc = gamma * jax.lax.rsqrt(var + eps)
        scale = sc.reshape(co, 1).astype(jnp.float32)
        bias = (beta - mean * sc).reshape(co, 1).astype(jnp.float32)
    return scale, bias


# ---------------------------------------------------------------------------
# One SharedMLP_single layer: conv1x1 -> BatchNorm (batch stats) -> ReLU
# ---------------------------------------------------------------------------
def shared_mlp_single(x, w, gamma, beta, *, bn_single, eps=1e-5,
                      compute_dtype=jnp.bfloat16, out_dtype=jnp.float32,
                      max_tile_l=8192, force_tiled=False):
    B, C, H, W_ = x.shape
    Co = w.shape[0]
    L = H * W_

    x3 = x.reshape(B, C, L)                       # free (contiguous) reshape
    w_c = w.astype(compute_dtype)
    g2 = gamma.astype(jnp.float32).reshape(-1, 1)  # (Co,1) or (1,1)
    b2 = beta.astype(jnp.float32).reshape(-1, 1)

    x_isz = x.dtype.itemsize
    out_isz = jnp.dtype(out_dtype).itemsize

    # ---------------- fast path: whole activation resident in VMEM ----------
    fast_bytes = (B * L * (C * x_isz + Co * 4 + Co * out_isz)
                  + 16 * Co * L + (1 << 16))
    if (not force_tiled) and fast_bytes <= _FAST_PATH_BYTES and B <= 16:
        out3 = pl.pallas_call(
            functools.partial(_fused_small_kernel, n_batch=B,
                              bn_single=bn_single, eps=eps, cdt=compute_dtype),
            out_shape=jax.ShapeDtypeStruct((B, Co, L), out_dtype),
            in_specs=[pl.BlockSpec(memory_space=pltpu.MemorySpace.VMEM)] * 4,
            out_specs=pl.BlockSpec(memory_space=pltpu.MemorySpace.VMEM),
            scratch_shapes=[pltpu.VMEM((B, Co, L), jnp.float32)],
            compiler_params=pltpu.CompilerParams(vmem_limit_bytes=_VMEM_LIMIT),
        )(x3, w_c, g2, b2)
        return out3.reshape(B, Co, H, W_)

    # ---------------- tiled path ---------------------------------------------
    # VMEM-aware, lane-dense tile width (double-buffered x + out + f32 y).
    per_col = 2 * C * x_isz + 2 * Co * out_isz + 4 * Co + 2 * C + 64
    cols = max(128, (_TILE_VMEM_BUDGET // per_col) // 128 * 128)
    tile_l = max(128, min(_round_up(L, 128), _round_up(max_tile_l, 128), cols))
    n_lt = _cdiv(L, tile_l)

    # With B == 1 split the spatial axis so both v7x TensorCores do stats work.
    n_outer = 2 if (B == 1 and n_lt >= 2) else 1
    n_inner = _cdiv(n_lt, n_outer)
    needs_mask = (L % tile_l != 0) or (n_outer * n_inner != n_lt)

    if n_outer == 1:
        x_stats_idx = lambda b, o, i: (b, 0, i)
    else:
        # Clamp duplicated trailing blocks; they are fully masked in-kernel.
        x_stats_idx = lambda b, o, i: (b, 0,
                                       jnp.minimum(o * n_inner + i, n_lt - 1))

    # ---- pass 1: X statistics (sum_x and Gram), pure x streaming -----------
    s_sum, s_gram = pl.pallas_call(
        functools.partial(_x_stats_kernel, cdt=compute_dtype, l_total=L,
                          tile_l=tile_l, n_inner=n_inner,
                          needs_mask=needs_mask),
        out_shape=(jax.ShapeDtypeStruct((B, n_outer, C, 1), jnp.float32),
                   jax.ShapeDtypeStruct((B, n_outer, C, C), jnp.float32)),
        grid_spec=pltpu.PrefetchScalarGridSpec(
            num_scalar_prefetch=0, grid=(B, n_outer, n_inner),
            in_specs=[pl.BlockSpec((pl.Squeezed(), C, tile_l), x_stats_idx)],
            out_specs=[
                pl.BlockSpec((pl.Squeezed(), pl.Squeezed(), C, 1),
                             lambda b, o, i: (b, o, 0, 0)),
                pl.BlockSpec((pl.Squeezed(), pl.Squeezed(), C, C),
                             lambda b, o, i: (b, o, 0, 0)),
            ]),
        compiler_params=pltpu.CompilerParams(
            dimension_semantics=("parallel", "parallel", "arbitrary"),
            vmem_limit_bytes=_VMEM_LIMIT),
        cost_estimate=pl.CostEstimate(
            flops=2 * B * n_outer * n_inner * tile_l * C * (C + 1),
            transcendentals=0,
            bytes_accessed=B * C * L * x_isz + B * n_outer * (C + C * C) * 4),
    )(x3)

    # ---- finalize: fold BN affine into per-channel scale/bias (tiny XLA) ---
    scale, bias = _finalize_scale_bias(s_sum, s_gram, w, gamma, beta,
                                       B * L, bn_single, eps)

    # ---- pass 2: conv + BN affine + ReLU, fused, output written direct -----
    out3 = pl.pallas_call(
        functools.partial(_conv_bn_relu_kernel, cdt=compute_dtype),
        out_shape=jax.ShapeDtypeStruct((B, Co, L), out_dtype),
        grid_spec=pltpu.PrefetchScalarGridSpec(
            num_scalar_prefetch=0, grid=(B, n_lt),
            in_specs=[
                pl.BlockSpec((pl.Squeezed(), C, tile_l), lambda b, j: (b, 0, j)),
                pl.BlockSpec((Co, C), lambda b, j: (0, 0)),
                pl.BlockSpec((Co, 1), lambda b, j: (0, 0)),
                pl.BlockSpec((Co, 1), lambda b, j: (0, 0)),
            ],
            out_specs=pl.BlockSpec((pl.Squeezed(), Co, tile_l),
                                   lambda b, j: (b, 0, j))),
        compiler_params=pltpu.CompilerParams(
            dimension_semantics=("parallel", "parallel"),
            vmem_limit_bytes=_VMEM_LIMIT),
        cost_estimate=pl.CostEstimate(
            flops=2 * B * Co * C * L + 2 * B * Co * L,
            transcendentals=0,
            bytes_accessed=(B * C * L * x_isz + Co * C * 2 + 8 * Co
                            + B * Co * L * out_isz)),
    )(x3, w_c, scale, bias)

    return out3.reshape(B, Co, H, W_)


# ---------------------------------------------------------------------------
# SharedMLP: stack of SharedMLP_single layers
# ---------------------------------------------------------------------------
def shared_mlp(x, weights, gammas, betas, *, bn, compute_dtype=jnp.bfloat16,
               max_tile_l=8192, force_tiled=False):
    n_layers = len(weights)
    out = x
    for idx, (w, g, b) in enumerate(zip(weights, gammas, betas)):
        is_last = idx == n_layers - 1
        out = shared_mlp_single(
            out, w, g, b, bn_single=(bn == "single"),
            compute_dtype=compute_dtype,
            out_dtype=(jnp.float32 if is_last else compute_dtype),
            max_tile_l=max_tile_l, force_tiled=force_tiled)
    return out


# ---------------------------------------------------------------------------
# Pure-JAX reference (correctness check only)
# ---------------------------------------------------------------------------
def _reference(x, weights, gammas, betas, bn, eps=1e-5):
    out = x
    for w, g, b in zip(weights, gammas, betas):
        Co = w.shape[0]
        y = jnp.einsum("oc,bchw->bohw", w, out)
        if bn == "single":
            mean = jnp.mean(y)
            var = jnp.mean((y - mean) ** 2)
            y = (y - mean) * jax.lax.rsqrt(var + eps) * g[0] + b[0]
        else:
            mean = jnp.mean(y, axis=(0, 2, 3), keepdims=True)
            var = jnp.mean((y - mean) ** 2, axis=(0, 2, 3), keepdims=True)
            y = ((y - mean) * jax.lax.rsqrt(var + eps)
                 * g.reshape(1, Co, 1, 1) + b.reshape(1, Co, 1, 1))
        out = jnp.maximum(y, 0.0)
    return out


if __name__ == "__main__":
    key = jax.random.PRNGKey(0)
    dim_list = [4, 32, 16]               # SharedMLP([4, 32, 16], bn)
    n_layers = len(dim_list) - 1

    keys = jax.random.split(key, 3 * n_layers + 4)
    weights, gammas_c, betas_c = [], [], []
    for i in range(n_layers):
        ci, co = dim_list[i], dim_list[i + 1]
        kw, kg, kb = keys[3 * i], keys[3 * i + 1], keys[3 * i + 2]
        bound = 1.0 / math.sqrt(ci)       # kaiming-uniform bound, fan_in = ci
        weights.append(jax.random.uniform(kw, (co, ci), jnp.float32,
                                          -bound, bound))
        gammas_c.append(1.0 + 0.1 * jax.random.normal(kg, (co,), jnp.float32))
        betas_c.append(0.1 * jax.random.normal(kb, (co,), jnp.float32))

    # (B, H, W, force_tiled, max_tile_l):
    #   fast single-kernel path / tiled with ragged last tile / tiled B=1
    #   (spatial outer split for the stats pass, clamped+masked extra tile)
    cases = [
        (2, 16, 16, False, 8192),
        (2, 16, 10, True, 128),
        (1, 16, 20, True, 128),
    ]
    xkeys = keys[3 * n_layers:]

    for bn in ("channel", "single"):      # bn=CH_out branch and bn='single'
        if bn == "single":
            gammas = [g[:1] for g in gammas_c]   # BatchNorm2d(1): scalar affine
            betas = [b[:1] for b in betas_c]
        else:
            gammas, betas = gammas_c, betas_c

        for ci_idx, (B, H, W, ft, mtl) in enumerate(cases):
            x = jax.random.normal(xkeys[ci_idx], (B, dim_list[0], H, W),
                                  jnp.float32)
            ref = _reference(x, weights, gammas, betas, bn)

            # f32 compute path: tight structural check.
            out = shared_mlp(x, weights, gammas, betas, bn=bn,
                             compute_dtype=jnp.float32,
                             force_tiled=ft, max_tile_l=mtl)
            out = jax.block_until_ready(out)
            assert out.shape == ref.shape
            err = float(jnp.max(jnp.abs(out - ref)))
            assert jnp.allclose(out, ref, atol=2e-3, rtol=2e-3), \
                ("f32", bn, B, H, W, err)

            # bf16 compute path (default): sanity check (bf16 input rounding).
            out_bf = shared_mlp(x, weights, gammas, betas, bn=bn,
                                force_tiled=ft, max_tile_l=mtl)
            out_bf = jax.block_until_ready(out_bf)
            err_bf = float(jnp.max(jnp.abs(out_bf - ref)))
            assert jnp.allclose(out_bf, ref, atol=1e-1, rtol=1e-1), \
                ("bf16", bn, B, H, W, err_bf)

    print("KERNEL_OK")
</pallas_src>

<mosaic_0001>
module attributes {stable_mosaic.version = 11 : i64} {
  func.func @_fused_small_kernel(%arg0: memref<2x4x256xf32, #tpu.memory_space<vmem>>, %arg1: memref<32x4xf32, #tpu.memory_space<vmem>>, %arg2: memref<32x1xf32, #tpu.memory_space<vmem>>, %arg3: memref<32x1xf32, #tpu.memory_space<vmem>>, %arg4: memref<2x32x256xf32, #tpu.memory_space<vmem>>, %arg5: memref<2x32x256xf32, #tpu.memory_space<vmem>>) attributes {dimension_semantics = [], scalar_prefetch = 0 : i64, scratch_operands = 1 : i64, tpu.core_type = #tpu.core_type<tc>} {
    %c0 = arith.constant 0 : index
    %c0_0 = arith.constant 0 : index
    %0 = vector.load %arg1[%c0, %c0_0] : memref<32x4xf32, #tpu.memory_space<vmem>>, vector<32x4xf32>
    %cst = arith.constant 0.000000e+00 : f32
    %1 = vector.broadcast %cst : f32 to vector<32x1xf32>
    %c0_1 = arith.constant 0 : index
    %c0_2 = arith.constant 0 : index
    %c0_3 = arith.constant 0 : index
    %2 = vector.load %arg0[%c0_1, %c0_2, %c0_3] : memref<2x4x256xf32, #tpu.memory_space<vmem>>, vector<1x4x256xf32>
    %3 = vector.shape_cast %2 : vector<1x4x256xf32> to vector<4x256xf32>
    %cst_4 = arith.constant dense<0.000000e+00> : vector<32x256xf32>
    %4 = tpu.matmul %0, %3, %cst_4 {dimension_numbers = #tpu.dot_dimension_numbers<[1], [0], [0], [1], [0, 0, 1, 1], [], []>} : vector<32x4xf32>, vector<4x256xf32>, vector<32x256xf32> -> vector<32x256xf32>
    %c0_5 = arith.constant 0 : index
    %c0_6 = arith.constant 0 : index
    %c0_7 = arith.constant 0 : index
    %5 = vector.load %arg5[%c0_5, %c0_6, %c0_7] : memref<2x32x256xf32, #tpu.memory_space<vmem>>, vector<1x32x256xf32>
    %6 = vector.shape_cast %5 : vector<1x32x256xf32> to vector<32x256xf32>
    %7 = vector.shape_cast %4 : vector<32x256xf32> to vector<1x32x256xf32>
    tpu.vector_store %arg5[%c0_5, %c0_6, %c0_7], %7 {strides = array<i32>} : memref<2x32x256xf32, #tpu.memory_space<vmem>>, vector<1x32x256xf32>,
    %cst_8 = arith.constant dense<0.000000e+00> : vector<32xf32>
    %8 = vector.multi_reduction <add>, %4, %cst_8 [1] : vector<32x256xf32> to vector<32xf32>
    %9 = vector.shape_cast %8 : vector<32xf32> to vector<32x1xf32>
    %10 = arith.addf %1, %9 : vector<32x1xf32>
    %c1 = arith.constant 1 : index
    %c0_9 = arith.constant 0 : index
    %c0_10 = arith.constant 0 : index
    %11 = vector.load %arg0[%c1, %c0_9, %c0_10] : memref<2x4x256xf32, #tpu.memory_space<vmem>>, vector<1x4x256xf32>
    %12 = vector.shape_cast %11 : vector<1x4x256xf32> to vector<4x256xf32>
    %cst_11 = arith.constant dense<0.000000e+00> : vector<32x256xf32>
    %13 = tpu.matmul %0, %12, %cst_11 {dimension_numbers = #tpu.dot_dimension_numbers<[1], [0], [0], [1], [0, 0, 1, 1], [], []>} : vector<32x4xf32>, vector<4x256xf32>, vector<32x256xf32> -> vector<32x256xf32>
    %c1_12 = arith.constant 1 : index
    %c0_13 = arith.constant 0 : index
    %c0_14 = arith.constant 0 : index
    %14 = vector.load %arg5[%c1_12, %c0_13, %c0_14] : memref<2x32x256xf32, #tpu.memory_space<vmem>>, vector<1x32x256xf32>
    %15 = vector.shape_cast %14 : vector<1x32x256xf32> to vector<32x256xf32>
    %16 = vector.shape_cast %13 : vector<32x256xf32> to vector<1x32x256xf32>
    tpu.vector_store %arg5[%c1_12, %c0_13, %c0_14], %16 {strides = array<i32>} : memref<2x32x256xf32, #tpu.memory_space<vmem>>, vector<1x32x256xf32>,
    %cst_15 = arith.constant dense<0.000000e+00> : vector<32xf32>
    %17 = vector.multi_reduction <add>, %13, %cst_15 [1] : vector<32x256xf32> to vector<32xf32>
    %18 = vector.shape_cast %17 : vector<32xf32> to vector<32x1xf32>
    %19 = arith.addf %10, %18 : vector<32x1xf32>
    %cst_16 = arith.constant 5.120000e+02 : f32
    %20 = vector.broadcast %cst_16 : f32 to vector<32x1xf32>
    %21 = arith.divf %19, %20 : vector<32x1xf32>
    %cst_17 = arith.constant 0.000000e+00 : f32
    %22 = vector.broadcast %cst_17 : f32 to vector<32x1xf32>
    %c0_18 = arith.constant 0 : index
    %c0_19 = arith.constant 0 : index
    %c0_20 = arith.constant 0 : index
    %23 = vector.load %arg5[%c0_18, %c0_19, %c0_20] : memref<2x32x256xf32, #tpu.memory_space<vmem>>, vector<1x32x256xf32>
    %24 = vector.shape_cast %23 : vector<1x32x256xf32> to vector<32x256xf32>
    %25 = vector.broadcast %21 : vector<32x1xf32> to vector<32x256xf32>
    %26 = arith.subf %24, %25 : vector<32x256xf32>
    %27 = arith.mulf %26, %26 : vector<32x256xf32>
    %cst_21 = arith.constant dense<0.000000e+00> : vector<32xf32>
    %28 = vector.multi_reduction <add>, %27, %cst_21 [1] : vector<32x256xf32> to vector<32xf32>
    %29 = vector.shape_cast %28 : vector<32xf32> to vector<32x1xf32>
    %30 = arith.addf %22, %29 : vector<32x1xf32>
    %c1_22 = arith.constant 1 : index
    %c0_23 = arith.constant 0 : index
    %c0_24 = arith.constant 0 : index
    %31 = vector.load %arg5[%c1_22, %c0_23, %c0_24] : memref<2x32x256xf32, #tpu.memory_space<vmem>>, vector<1x32x256xf32>
    %32 = vector.shape_cast %31 : vector<1x32x256xf32> to vector<32x256xf32>
    %33 = vector.broadcast %21 : vector<32x1xf32> to vector<32x256xf32>
    %34 = arith.subf %32, %33 : vector<32x256xf32>
    %35 = arith.mulf %34, %34 : vector<32x256xf32>
    %cst_25 = arith.constant dense<0.000000e+00> : vector<32xf32>
    %36 = vector.multi_reduction <add>, %35, %cst_25 [1] : vector<32x256xf32> to vector<32xf32>
    %37 = vector.shape_cast %36 : vector<32xf32> to vector<32x1xf32>
    %38 = arith.addf %30, %37 : vector<32x1xf32>
    %cst_26 = arith.constant 5.120000e+02 : f32
    %39 = vector.broadcast %cst_26 : f32 to vector<32x1xf32>
    %40 = arith.divf %38, %39 : vector<32x1xf32>
    %c0_27 = arith.constant 0 : index
    %c0_28 = arith.constant 0 : index
    %41 = vector.load %arg2[%c0_27, %c0_28] : memref<32x1xf32, #tpu.memory_space<vmem>>, vector<32x1xf32>
    %cst_29 = arith.constant 9.99999974E-6 : f32
    %42 = vector.broadcast %cst_29 : f32 to vector<32x1xf32>
    %43 = arith.addf %40, %42 : vector<32x1xf32>
    %44 = math.rsqrt %43 : vector<32x1xf32>
    %45 = arith.mulf %41, %44 : vector<32x1xf32>
    %c0_30 = arith.constant 0 : index
    %c0_31 = arith.constant 0 : index
    %46 = vector.load %arg3[%c0_30, %c0_31] : memref<32x1xf32, #tpu.memory_space<vmem>>, vector<32x1xf32>
    %47 = arith.mulf %21, %45 : vector<32x1xf32>
    %48 = arith.subf %46, %47 : vector<32x1xf32>
    %c0_32 = arith.constant 0 : index
    %c0_33 = arith.constant 0 : index
    %c0_34 = arith.constant 0 : index
    %49 = vector.load %arg5[%c0_32, %c0_33, %c0_34] : memref<2x32x256xf32, #tpu.memory_space<vmem>>, vector<1x32x256xf32>
    %50 = vector.shape_cast %49 : vector<1x32x256xf32> to vector<32x256xf32>
    %51 = vector.broadcast %45 : vector<32x1xf32> to vector<32x256xf32>
    %52 = arith.mulf %50, %51 : vector<32x256xf32>
    %53 = vector.broadcast %48 : vector<32x1xf32> to vector<32x256xf32>
    %54 = arith.addf %52, %53 : vector<32x256xf32>
    %cst_35 = arith.constant 0.000000e+00 : f32
    %55 = vector.broadcast %cst_35 : f32 to vector<32x256xf32>
    %56 = arith.maximumf %54, %55 : vector<32x256xf32>
    %c0_36 = arith.constant 0 : index
    %c0_37 = arith.constant 0 : index
    %c0_38 = arith.constant 0 : index
    %57 = vector.load %arg4[%c0_36, %c0_37, %c0_38] : memref<2x32x256xf32, #tpu.memory_space<vmem>>, vector<1x32x256xf32>
    %58 = vector.shape_cast %57 : vector<1x32x256xf32> to vector<32x256xf32>
    %59 = vector.shape_cast %56 : vector<32x256xf32> to vector<1x32x256xf32>
    tpu.vector_store %arg4[%c0_36, %c0_37, %c0_38], %59 {strides = array<i32>} : memref<2x32x256xf32, #tpu.memory_space<vmem>>, vector<1x32x256xf32>,
    %c1_39 = arith.constant 1 : index
    %c0_40 = arith.constant 0 : index
    %c0_41 = arith.constant 0 : index
    %60 = vector.load %arg5[%c1_39, %c0_40, %c0_41] : memref<2x32x256xf32, #tpu.memory_space<vmem>>, vector<1x32x256xf32>
    %61 = vector.shape_cast %60 : vector<1x32x256xf32> to vector<32x256xf32>
    %62 = vector.broadcast %45 : vector<32x1xf32> to vector<32x256xf32>
    %63 = arith.mulf %61, %62 : vector<32x256xf32>
    %64 = vector.broadcast %48 : vector<32x1xf32> to vector<32x256xf32>
    %65 = arith.addf %63, %64 : vector<32x256xf32>
    %cst_42 = arith.constant 0.000000e+00 : f32
    %66 = vector.broadcast %cst_42 : f32 to vector<32x256xf32>
    %67 = arith.maximumf %65, %66 : vector<32x256xf32>
    %c1_43 = arith.constant 1 : index
    %c0_44 = arith.constant 0 : index
    %c0_45 = arith.constant 0 : index
    %68 = vector.load %arg4[%c1_43, %c0_44, %c0_45] : memref<2x32x256xf32, #tpu.memory_space<vmem>>, vector<1x32x256xf32>
    %69 = vector.shape_cast %68 : vector<1x32x256xf32> to vector<32x256xf32>
    %70 = vector.shape_cast %67 : vector<32x256xf32> to vector<1x32x256xf32>
    tpu.vector_store %arg4[%c1_43, %c0_44, %c0_45], %70 {strides = array<i32>} : memref<2x32x256xf32, #tpu.memory_space<vmem>>, vector<1x32x256xf32>,
    return
  }
}

</mosaic_0001>

<llo_original>
// kernel: tpu_custom_call.1
$region0: #{tpu_custom_call.1}
  #allocation0 [shape = 'u32[]', space=smem, size = 0x4, offset = 0x4, fixed_abs, tag = 'smem constant byte address 0x4 - core index']
  #allocation1 [shape = 'u32[144,128]{1,0:T(1,128)}', space=vmem, size = 0x12000, scoped, tag = 'internal scratch']
  #allocation2 [shape = 'f32[2,32,256]{2,1,0:T(8,128)}', space=vmem, size = 0x10000, scoped, tag = 'scratch operand']
  %s0 = inlined_call_operand.vmem [shape: f32[2,4,256], index: 0, kind: input, shape index: {}]
  %s1 = inlined_call_operand.vmem [shape: f32[32,4], index: 1, kind: input, shape index: {}]
  %s2 = inlined_call_operand.vmem [shape: f32[32,1], index: 2, kind: input, shape index: {}]
  %s3 = inlined_call_operand.vmem [shape: f32[32,1], index: 3, kind: input, shape index: {}]
  %s4 = inlined_call_operand.hbm [shape: f32[2,32,256], index: 4, kind: output, shape index: {}]
  %s5 = sld [smem:[#allocation0]]
  $region26: #{tpu_custom_call.1} parent=0
    _
  %s7 = ssub.s32 1, %s5
  %s8 = scalar_select 0, %s7, %s5
  $region1: #{tpu_custom_call.1} parent=0
    #allocation3 [shape = 'u8[65536]{0}', space=vmem, size = 0x10000, scoped, tag = 'output window, operand 0, single buffered']
    #allocation4 [shape = 's32[1]{0}', space=sflag, size = 0x4, scoped, tag = 'scoped memory for tpu_custom_call.1']
    %9 = vsyncpa [#allocation4], 0
    // Predicated region
    $region2: #{tpu_custom_call.1} parent=1 // pred_check
      _
    $region3: #{tpu_custom_call.1} parent=1 // pred_check_branch
      %11 = sbr.rel (0) target = $region5
    $region4: #{tpu_custom_call.1} parent=1 // pred_region
      _
    $region5: #{tpu_custom_call.1} parent=1 // pred_fallthru
      _
    // Predicated region
    $region6: #{tpu_custom_call.1} parent=1 // pred_check
      _
    $region7: #{tpu_custom_call.1} parent=1 // pred_check_branch
      %13 = sbr.rel (0) target = $region9
    $region8: #{tpu_custom_call.1} parent=1 // pred_region
      _
    $region9: #{tpu_custom_call.1} parent=1 // pred_fallthru
      _
    // Predicated region
    $region10: #{tpu_custom_call.1} parent=1 // pred_check
      _
    $region11: #{tpu_custom_call.1} parent=1 // pred_check_branch
      %15 = sbr.rel (0) target = $region13
    $region12: #{tpu_custom_call.1} parent=1 // pred_region
      _
    $region13: #{tpu_custom_call.1} parent=1 // pred_fallthru
      _
    // Predicated region
    $region14: #{tpu_custom_call.1} parent=1 // pred_check
      _
    $region15: #{tpu_custom_call.1} parent=1 // pred_check_branch
      %17 = sbr.rel (0) target = $region17
    $region16: #{tpu_custom_call.1} parent=1 // pred_region
      _
    $region17: #{tpu_custom_call.1} parent=1 // pred_fallthru
      _
    %v18 = vld [vmem:[%s1] sm:$0xff]
    %v19 = vld [vmem:[%s1 + $0x8] sm:$0xff]
    %v20 = vld [vmem:[%s1 + $0x10] sm:$0xff]
    %v21 = vld [vmem:[%s1 + $0x18] sm:$0xff]
    %v22 = vld [vmem:[%s0] sm:$0xff]
    %v24 = vcombine.high %v22, %v22
    %vm25 = vcmask 31744
    %v27 = vsel %vm25, %v18, 0
    %v30 = vsel %vm25, %v19, 0
    %v33 = vsel %vm25, %v20, 0
    %v36 = vsel %vm25, %v21, 0
    %vm38 = vcmask 1043456
    %v39 = vsel %vm38, %v22, 0
    %v41 = vsel %vm38, %v24, 0
    %43 = vmatprep.subr.mxu0 %v41
    %44 = vmatpush1.msra.mxu0 %v39
    %45 = vmatprep.subr.mxu0 0.0
    %46 = vmatpush1.msra.mxu0 0.0
    %47 = vmatprep.subr.mxu0 0.0
    %48 = vmatpush1.msra.mxu0 0.0
    %49 = vmatprep.subr.mxu0 0.0
    %50 = vmatpush1.msra.mxu0 0.0
    %51 = vmatprep.subr.mxu0 0.0
    %52 = vmatpush1.msra.mxu0 0.0
    %53 = vmatprep.subr.mxu0 0.0
    %54 = vmatpush1.msra.mxu0 0.0
    %55 = vmatprep.subr.mxu0 0.0
    %56 = vmatpush1.msra.mxu0 0.0
    %57 = vmatprep.subr.mxu0 0.0
    %58 = vmatpush1.msra.mxu0 0.0
    %59 = vmatprep.subr.mxu0 0.0
    %60 = vmatpush1.msra.mxu0 0.0
    %61 = vmatprep.subr.mxu0 0.0
    %62 = vmatpush1.msra.mxu0 0.0
    %63 = vmatprep.subr.mxu0 0.0
    %64 = vmatpush1.msra.mxu0 0.0
    %65 = vmatprep.subr.mxu0 0.0
    %66 = vmatpush1.msra.mxu0 0.0
    %67 = vmatprep.subr.mxu0 0.0
    %68 = vmatpush1.msra.mxu0 0.0
    %69 = vmatprep.subr.mxu0 0.0
    %70 = vmatpush1.msra.mxu0 0.0
    %71 = vmatprep.subr.mxu0 0.0
    %72 = vmatpush1.msra.mxu0 0.0
    %73 = vmatprep.subr.mxu0 0.0
    %74 = vmatpush1.msra.mxu0 0.0
    %75 = vmatprep.subr.mxu0 0.0
    %76 = vmatpush1.msra.mxu0 0.0
    %77 = vmatprep.subr.mxu0 0.0
    %78 = vmatpush1.msra.mxu0 0.0
    %79 = vmatprep.subr.mxu0 0.0
    %80 = vmatpush1.msra.mxu0 0.0
    %81 = vmatprep.subr.mxu0 0.0
    %82 = vmatpush1.msra.mxu0 0.0
    %83 = vmatprep.subr.mxu0 0.0
    %84 = vmatpush1.msra.mxu0 0.0
    %85 = vmatprep.subr.mxu0 0.0
    %86 = vmatpush1.msra.mxu0 0.0
    %87 = vmatprep.subr.mxu0 0.0
    %88 = vmatpush1.msra.mxu0 0.0
    %89 = vmatprep.subr.mxu0 0.0
    %90 = vmatpush1.msra.mxu0 0.0
    %91 = vmatprep.subr.mxu0 0.0
    %92 = vmatpush1.msra.mxu0 0.0
    %93 = vmatprep.subr.mxu0 0.0
    %94 = vmatpush1.msra.mxu0 0.0
    %95 = vmatprep.subr.mxu0 0.0
    %96 = vmatpush1.msra.mxu0 0.0
    %97 = vmatprep.subr.mxu0 0.0
    %98 = vmatpush1.msra.mxu0 0.0
    %99 = vmatprep.subr.mxu0 0.0
    %100 = vmatpush1.msra.mxu0 0.0
    %101 = vmatprep.subr.mxu0 0.0
    %102 = vmatpush1.msra.mxu0 0.0
    %103 = vmatprep.subr.mxu0 0.0
    %104 = vmatpush1.msra.mxu0 0.0
    %105 = vmatprep.subr.mxu0 0.0
    %106 = vmatpush1.msra.mxu0 0.0
    %107 = vmatprep.mubr.f32.mxu0 0.0
    %108 = vmatmul.mubr.f32.gmra.mrb[0].mxu0 %v27
    %v109 = vpop.f32.mrb[0].mxu0
    %v110 = vadd.f32 0.0, %v109
    %v111 = vpop.f32.mrb[0].mxu0
    %v112 = vadd.f32 0.0, %v111
    %113 = vmatprep.mubr.f32.mxu0 0.0
    %114 = vmatmul.mubr.f32.gmra.mrb[0].mxu0 %v30
    %v115 = vpop.f32.mrb[0].mxu0
    %v116 = vadd.f32 0.0, %v115
    %v117 = vpop.f32.mrb[0].mxu0
    %v118 = vadd.f32 0.0, %v117
    %119 = vmatprep.mubr.f32.mxu0 0.0
    %120 = vmatmul.mubr.f32.gmra.mrb[0].mxu0 %v33
    %v121 = vpop.f32.mrb[0].mxu0
    %v122 = vadd.f32 0.0, %v121
    %v123 = vpop.f32.mrb[0].mxu0
    %v124 = vadd.f32 0.0, %v123
    %125 = vmatprep.mubr.f32.mxu0 0.0
    %126 = vmatmul.mubr.f32.gmra.mrb[0].mxu0 %v36
    %v127 = vpop.f32.mrb[0].mxu0
    %v128 = vadd.f32 0.0, %v127
    %v129 = vpop.f32.mrb[0].mxu0
    %v130 = vadd.f32 0.0, %v129
    %131 = vdwg.mxu0
    %132 = vst [vmem:[#allocation2] sm:$0xff] %v110
    %133 = vst [vmem:[#allocation2 + $0x8] sm:$0xff] %v112
    %134 = vst [vmem:[#allocation2 + $0x10] sm:$0xff] %v116
    %135 = vst [vmem:[#allocation2 + $0x18] sm:$0xff] %v118
    %136 = vst [vmem:[#allocation2 + $0x20] sm:$0xff] %v122
    %137 = vst [vmem:[#allocation2 + $0x28] sm:$0xff] %v124
    %138 = vst [vmem:[#allocation2 + $0x30] sm:$0xff] %v128
    %139 = vst [vmem:[#allocation2 + $0x38] sm:$0xff] %v130
    %v140 = vadd.f32 %v110, %v112
    %141 = vadd.xlane.f32.xlu0 %v140
    %v142 = vpop.xlane.xlu0 %141
    %v143 = vadd.f32 %v116, %v118
    %144 = vadd.xlane.f32.xlu0 %v143
    %v145 = vpop.xlane.xlu0 %144
    %v146 = vadd.f32 %v122, %v124
    %147 = vadd.xlane.f32.xlu0 %v146
    %v148 = vpop.xlane.xlu0 %147
    %v149 = vadd.f32 %v128, %v130
    %150 = vadd.xlane.f32.xlu0 %v149
    %v151 = vpop.xlane.xlu0 %150
    %v152 = vadd.f32 %v142, 0.0
    %v153 = vadd.f32 %v145, 0.0
    %v154 = vadd.f32 %v148, 0.0
    %v155 = vadd.f32 %v151, 0.0
    %s156 = scalar_lea.vmem %s0, 8
    %v157 = vld [vmem:[%s156] sm:$0xff]
    %v159 = vcombine.high %v157, %v157
    %v160 = vsel %vm38, %v157, 0
    %v162 = vsel %vm38, %v159, 0
    %164 = vmatprep.subr.mxu0 %v162
    %165 = vmatpush1.msra.mxu0 %v160
    %166 = vmatprep.subr.mxu0 0.0
    %167 = vmatpush1.msra.mxu0 0.0
    %168 = vmatprep.subr.mxu0 0.0
    %169 = vmatpush1.msra.mxu0 0.0
    %170 = vmatprep.subr.mxu0 0.0
    %171 = vmatpush1.msra.mxu0 0.0
    %172 = vmatprep.subr.mxu0 0.0
    %173 = vmatpush1.msra.mxu0 0.0
    %174 = vmatprep.subr.mxu0 0.0
    %175 = vmatpush1.msra.mxu0 0.0
    %176 = vmatprep.subr.mxu0 0.0
    %177 = vmatpush1.msra.mxu0 0.0
    %178 = vmatprep.subr.mxu0 0.0
    %179 = vmatpush1.msra.mxu0 0.0
    %180 = vmatprep.subr.mxu0 0.0
    %181 = vmatpush1.msra.mxu0 0.0
    %182 = vmatprep.subr.mxu0 0.0
    %183 = vmatpush1.msra.mxu0 0.0
    %184 = vmatprep.subr.mxu0 0.0
    %185 = vmatpush1.msra.mxu0 0.0
    %186 = vmatprep.subr.mxu0 0.0
    %187 = vmatpush1.msra.mxu0 0.0
    %188 = vmatprep.subr.mxu0 0.0
    %189 = vmatpush1.msra.mxu0 0.0
    %190 = vmatprep.subr.mxu0 0.0
    %191 = vmatpush1.msra.mxu0 0.0
    %192 = vmatprep.subr.mxu0 0.0
    %193 = vmatpush1.msra.mxu0 0.0
    %194 = vmatprep.subr.mxu0 0.0
    %195 = vmatpush1.msra.mxu0 0.0
    %196 = vmatprep.subr.mxu0 0.0
    %197 = vmatpush1.msra.mxu0 0.0
    %198 = vmatprep.subr.mxu0 0.0
    %199 = vmatpush1.msra.mxu0 0.0
    %200 = vmatprep.subr.mxu0 0.0
    %201 = vmatpush1.msra.mxu0 0.0
    %202 = vmatprep.subr.mxu0 0.0
    %203 = vmatpush1.msra.mxu0 0.0
    %204 = vmatprep.subr.mxu0 0.0
    %205 = vmatpush1.msra.mxu0 0.0
    %206 = vmatprep.subr.mxu0 0.0
    %207 = vmatpush1.msra.mxu0 0.0
    %208 = vmatprep.subr.mxu0 0.0
    %209 = vmatpush1.msra.mxu0 0.0
    %210 = vmatprep.subr.mxu0 0.0
    %211 = vmatpush1.msra.mxu0 0.0
    %212 = vmatprep.subr.mxu0 0.0
    %213 = vmatpush1.msra.mxu0 0.0
    %214 = vmatprep.subr.mxu0 0.0
    %215 = vmatpush1.msra.mxu0 0.0
    %216 = vmatprep.subr.mxu0 0.0
    %217 = vmatpush1.msra.mxu0 0.0
    %218 = vmatprep.subr.mxu0 0.0
    %219 = vmatpush1.msra.mxu0 0.0
    %220 = vmatprep.subr.mxu0 0.0
    %221 = vmatpush1.msra.mxu0 0.0
    %222 = vmatprep.subr.mxu0 0.0
    %223 = vmatpush1.msra.mxu0 0.0
    %224 = vmatprep.subr.mxu0 0.0
    %225 = vmatpush1.msra.mxu0 0.0
    %226 = vmatprep.subr.mxu0 0.0
    %227 = vmatpush1.msra.mxu0 0.0
    %228 = vmatprep.mubr.f32.mxu0 0.0
    %229 = vmatmul.mubr.f32.gmra.mrb[0].mxu0 %v27
    %v230 = vpop.f32.mrb[0].mxu0
    %v231 = vadd.f32 0.0, %v230
    %v232 = vpop.f32.mrb[0].mxu0
    %v233 = vadd.f32 0.0, %v232
    %234 = vmatprep.mubr.f32.mxu0 0.0
    %235 = vmatmul.mubr.f32.gmra.mrb[0].mxu0 %v30
    %v236 = vpop.f32.mrb[0].mxu0
    %v237 = vadd.f32 0.0, %v236
    %v238 = vpop.f32.mrb[0].mxu0
    %v239 = vadd.f32 0.0, %v238
    %240 = vmatprep.mubr.f32.mxu0 0.0
    %241 = vmatmul.mubr.f32.gmra.mrb[0].mxu0 %v33
    %v242 = vpop.f32.mrb[0].mxu0
    %v243 = vadd.f32 0.0, %v242
    %v244 = vpop.f32.mrb[0].mxu0
    %v245 = vadd.f32 0.0, %v244
    %246 = vmatprep.mubr.f32.mxu0 0.0
    %247 = vmatmul.mubr.f32.gmra.mrb[0].mxu0 %v36
    %v248 = vpop.f32.mrb[0].mxu0
    %v249 = vadd.f32 0.0, %v248
    %v250 = vpop.f32.mrb[0].mxu0
    %v251 = vadd.f32 0.0, %v250
    %252 = vdwg.mxu0
    %s253 = scalar_lea.vmem [#allocation2], 64
    %254 = vst [vmem:[%s253] sm:$0xff] %v231
    %255 = vst [vmem:[%s253 + $0x8] sm:$0xff] %v233
    %256 = vst [vmem:[%s253 + $0x10] sm:$0xff] %v237
    %257 = vst [vmem:[%s253 + $0x18] sm:$0xff] %v239
    %258 = vst [vmem:[%s253 + $0x20] sm:$0xff] %v243
    %259 = vst [vmem:[%s253 + $0x28] sm:$0xff] %v245
    %260 = vst [vmem:[%s253 + $0x30] sm:$0xff] %v249
    %261 = vst [vmem:[%s253 + $0x38] sm:$0xff] %v251
    %v262 = vadd.f32 %v231, %v233
    %263 = vadd.xlane.f32.xlu0 %v262
    %v264 = vpop.xlane.xlu0 %263
    %v265 = vadd.f32 %v237, %v239
    %266 = vadd.xlane.f32.xlu0 %v265
    %v267 = vpop.xlane.xlu0 %266
    %v268 = vadd.f32 %v243, %v245
    %269 = vadd.xlane.f32.xlu0 %v268
    %v270 = vpop.xlane.xlu0 %269
    %v271 = vadd.f32 %v249, %v251
    %272 = vadd.xlane.f32.xlu0 %v271
    %v273 = vpop.xlane.xlu0 %272
    %v274 = vadd.f32 %v152, %v264
    %v275 = vadd.f32 %v153, %v267
    %v276 = vadd.f32 %v154, %v270
    %v277 = vadd.f32 %v155, %v273
    %v278 = vrcp.pop 512.0
    %v279 = vmul.f32 %v274, %v278
    %v280 = vmul.f32 %v275, %v278
    %v281 = vmul.f32 %v276, %v278
    %v282 = vmul.f32 %v277, %v278
    %v283 = vld [vmem:[#allocation2] sm:$0xff]
    %v284 = vld [vmem:[#allocation2 + $0x8] sm:$0xff]
    %v285 = vld [vmem:[#allocation2 + $0x10] sm:$0xff]
    %v286 = vld [vmem:[#allocation2 + $0x18] sm:$0xff]
    %v287 = vld [vmem:[#allocation2 + $0x20] sm:$0xff]
    %v288 = vld [vmem:[#allocation2 + $0x28] sm:$0xff]
    %v289 = vld [vmem:[#allocation2 + $0x30] sm:$0xff]
    %v290 = vld [vmem:[#allocation2 + $0x38] sm:$0xff]
    %v291 = vsub.f32 %v283, %v279
    %v292 = vsub.f32 %v284, %v279
    %v293 = vsub.f32 %v285, %v280
    %v294 = vsub.f32 %v286, %v280
    %v295 = vsub.f32 %v287, %v281
    %v296 = vsub.f32 %v288, %v281
    %v297 = vsub.f32 %v289, %v282
    %v298 = vsub.f32 %v290, %v282
    %v299 = vmul.f32 %v291, %v291
    %v300 = vmul.f32 %v292, %v292
    %v301 = vmul.f32 %v293, %v293
    %v302 = vmul.f32 %v294, %v294
    %v303 = vmul.f32 %v295, %v295
    %v304 = vmul.f32 %v296, %v296
    %v305 = vmul.f32 %v297, %v297
    %v306 = vmul.f32 %v298, %v298
    %v307 = vadd.f32 %v299, %v300
    %308 = vadd.xlane.f32.xlu0 %v307
    %v309 = vpop.xlane.xlu0 %308
    %v310 = vadd.f32 %v301, %v302
    %311 = vadd.xlane.f32.xlu0 %v310
    %v312 = vpop.xlane.xlu0 %311
    %v313 = vadd.f32 %v303, %v304
    %314 = vadd.xlane.f32.xlu0 %v313
    %v315 = vpop.xlane.xlu0 %314
    %v316 = vadd.f32 %v305, %v306
    %317 = vadd.xlane.f32.xlu0 %v316
    %v318 = vpop.xlane.xlu0 %317
    %v319 = vadd.f32 %v309, 0.0
    %v320 = vadd.f32 %v312, 0.0
    %v321 = vadd.f32 %v315, 0.0
    %v322 = vadd.f32 %v318, 0.0
    %v323 = vld [vmem:[%s253] sm:$0xff]
    %v324 = vld [vmem:[%s253 + $0x8] sm:$0xff]
    %v325 = vld [vmem:[%s253 + $0x10] sm:$0xff]
    %v326 = vld [vmem:[%s253 + $0x18] sm:$0xff]
    %v327 = vld [vmem:[%s253 + $0x20] sm:$0xff]
    %v328 = vld [vmem:[%s253 + $0x28] sm:$0xff]
    %v329 = vld [vmem:[%s253 + $0x30] sm:$0xff]
    %v330 = vld [vmem:[%s253 + $0x38] sm:$0xff]
    %v331 = vsub.f32 %v323, %v279
    %v332 = vsub.f32 %v324, %v279
    %v333 = vsub.f32 %v325, %v280
    %v334 = vsub.f32 %v326, %v280
    %v335 = vsub.f32 %v327, %v281
    %v336 = vsub.f32 %v328, %v281
    %v337 = vsub.f32 %v329, %v282
    %v338 = vsub.f32 %v330, %v282
    %v339 = vmul.f32 %v331, %v331
    %v340 = vmul.f32 %v332, %v332
    %v341 = vmul.f32 %v333, %v333
    %v342 = vmul.f32 %v334, %v334
    %v343 = vmul.f32 %v335, %v335
    %v344 = vmul.f32 %v336, %v336
    %v345 = vmul.f32 %v337, %v337
    %v346 = vmul.f32 %v338, %v338
    %v347 = vadd.f32 %v339, %v340
    %348 = vadd.xlane.f32.xlu0 %v347
    %v349 = vpop.xlane.xlu0 %348
    %v350 = vadd.f32 %v341, %v342
    %351 = vadd.xlane.f32.xlu0 %v350
    %v352 = vpop.xlane.xlu0 %351
    %v353 = vadd.f32 %v343, %v344
    %354 = vadd.xlane.f32.xlu0 %v353
    %v355 = vpop.xlane.xlu0 %354
    %v356 = vadd.f32 %v345, %v346
    %357 = vadd.xlane.f32.xlu0 %v356
    %v358 = vpop.xlane.xlu0 %357
    %v359 = vadd.f32 %v319, %v349
    %v360 = vadd.f32 %v320, %v352
    %v361 = vadd.f32 %v321, %v355
    %v362 = vadd.f32 %v322, %v358
    %v363 = vmul.f32 %v359, %v278
    %v364 = vmul.f32 %v360, %v278
    %v365 = vmul.f32 %v361, %v278
    %v366 = vmul.f32 %v362, %v278
    %v367 = vld [vmem:[%s2] sm:$0xff]
    %v368 = vld [vmem:[%s2 + $0x8] sm:$0xff]
    %v369 = vld [vmem:[%s2 + $0x10] sm:$0xff]
    %v370 = vld [vmem:[%s2 + $0x18] sm:$0xff]
    %v371 = vadd.f32 %v363, 1e-05
    %v372 = vadd.f32 %v364, 1e-05
    %v373 = vadd.f32 %v365, 1e-05
    %v374 = vadd.f32 %v366, 1e-05
    %v375 = vrsqrt.pop %v371
    %v376 = vrsqrt.pop %v372
    %v377 = vrsqrt.pop %v373
    %v378 = vrsqrt.pop %v374
    %v379 = vmul.f32 %v367, %v375
    %v380 = vmul.f32 %v368, %v376
    %v381 = vmul.f32 %v369, %v377
    %v382 = vmul.f32 %v370, %v378
    %v383 = vld [vmem:[%s3] sm:$0xff]
    %v384 = vld [vmem:[%s3 + $0x8] sm:$0xff]
    %v385 = vld [vmem:[%s3 + $0x10] sm:$0xff]
    %v386 = vld [vmem:[%s3 + $0x18] sm:$0xff]
    %v387 = vmul.f32 %v279, %v379
    %v388 = vmul.f32 %v280, %v380
    %v389 = vmul.f32 %v281, %v381
    %v390 = vmul.f32 %v282, %v382
    %v391 = vsub.f32 %v383, %v387
    %v392 = vsub.f32 %v384, %v388
    %v393 = vsub.f32 %v385, %v389
    %v394 = vsub.f32 %v386, %v390
    %396 = vset.pattern.permute.xlu0 0
    %397 = vperm.xlu0 %396, %v379
    %v398 = vpop.permute.xlu0 %397
    %401 = vset.pattern.permute.xlu0 0
    %402 = vperm.xlu0 %401, %v380
    %v403 = vpop.permute.xlu0 %402
    %406 = vset.pattern.permute.xlu0 0
    %407 = vperm.xlu0 %406, %v381
    %v408 = vpop.permute.xlu0 %407
    %411 = vset.pattern.permute.xlu0 0
    %412 = vperm.xlu0 %411, %v382
    %v413 = vpop.permute.xlu0 %412
    %v415 = vmul.f32 %v283, %v398
    %v416 = vmul.f32 %v284, %v398
    %v417 = vmul.f32 %v285, %v403
    %v418 = vmul.f32 %v286, %v403
    %v419 = vmul.f32 %v287, %v408
    %v420 = vmul.f32 %v288, %v408
    %v421 = vmul.f32 %v289, %v413
    %v422 = vmul.f32 %v290, %v413
    %424 = vset.pattern.permute.xlu0 0
    %425 = vperm.xlu0 %424, %v391
    %v426 = vpop.permute.xlu0 %425
    %429 = vset.pattern.permute.xlu0 0
    %430 = vperm.xlu0 %429, %v392
    %v431 = vpop.permute.xlu0 %430
    %434 = vset.pattern.permute.xlu0 0
    %435 = vperm.xlu0 %434, %v393
    %v436 = vpop.permute.xlu0 %435
    %439 = vset.pattern.permute.xlu0 0
    %440 = vperm.xlu0 %439, %v394
    %v441 = vpop.permute.xlu0 %440
    %v443 = vadd.f32 %v415, %v426
    %v444 = vadd.f32 %v416, %v426
    %v445 = vadd.f32 %v417, %v431
    %v446 = vadd.f32 %v418, %v431
    %v447 = vadd.f32 %v419, %v436
    %v448 = vadd.f32 %v420, %v436
    %v449 = vadd.f32 %v421, %v441
    %v450 = vadd.f32 %v422, %v441
    %v451 = vmax.f32 %v443, 0.0
    %v452 = vmax.f32 %v444, 0.0
    %v453 = vmax.f32 %v445, 0.0
    %v454 = vmax.f32 %v446, 0.0
    %v455 = vmax.f32 %v447, 0.0
    %v456 = vmax.f32 %v448, 0.0
    %v457 = vmax.f32 %v449, 0.0
    %v458 = vmax.f32 %v450, 0.0
    %459 = vst [vmem:[#allocation3] sm:$0xff] %v451
    %460 = vst [vmem:[#allocation3 + $0x8] sm:$0xff] %v452
    %461 = vst [vmem:[#allocation3 + $0x10] sm:$0xff] %v453
    %462 = vst [vmem:[#allocation3 + $0x18] sm:$0xff] %v454
    %463 = vst [vmem:[#allocation3 + $0x20] sm:$0xff] %v455
    %464 = vst [vmem:[#allocation3 + $0x28] sm:$0xff] %v456
    %465 = vst [vmem:[#allocation3 + $0x30] sm:$0xff] %v457
    %466 = vst [vmem:[#allocation3 + $0x38] sm:$0xff] %v458
    %v467 = vld [vmem:[%s253] sm:$0xff]
    %v468 = vld [vmem:[%s253 + $0x8] sm:$0xff]
    %v469 = vld [vmem:[%s253 + $0x10] sm:$0xff]
    %v470 = vld [vmem:[%s253 + $0x18] sm:$0xff]
    %v471 = vld [vmem:[%s253 + $0x20] sm:$0xff]
    %v472 = vld [vmem:[%s253 + $0x28] sm:$0xff]
    %v473 = vld [vmem:[%s253 + $0x30] sm:$0xff]
    %v474 = vld [vmem:[%s253 + $0x38] sm:$0xff]
    %v475 = vmul.f32 %v467, %v398
    %v476 = vmul.f32 %v468, %v398
    %v477 = vmul.f32 %v469, %v403
    %v478 = vmul.f32 %v470, %v403
    %v479 = vmul.f32 %v471, %v408
    %v480 = vmul.f32 %v472, %v408
    %v481 = vmul.f32 %v473, %v413
    %v482 = vmul.f32 %v474, %v413
    %v483 = vadd.f32 %v475, %v426
    %v484 = vadd.f32 %v476, %v426
    %v485 = vadd.f32 %v477, %v431
    %v486 = vadd.f32 %v478, %v431
    %v487 = vadd.f32 %v479, %v436
    %v488 = vadd.f32 %v480, %v436
    %v489 = vadd.f32 %v481, %v441
    %v490 = vadd.f32 %v482, %v441
    %v491 = vmax.f32 %v483, 0.0
    %v492 = vmax.f32 %v484, 0.0
    %v493 = vmax.f32 %v485, 0.0
    %v494 = vmax.f32 %v486, 0.0
    %v495 = vmax.f32 %v487, 0.0
    %v496 = vmax.f32 %v488, 0.0
    %v497 = vmax.f32 %v489, 0.0
    %v498 = vmax.f32 %v490, 0.0
    %s499 = scalar_lea.vmem [#allocation3], 64
    %500 = vst [vmem:[%s499] sm:$0xff] %v491
    %501 = vst [vmem:[%s499 + $0x8] sm:$0xff] %v492
    %502 = vst [vmem:[%s499 + $0x10] sm:$0xff] %v493
    %503 = vst [vmem:[%s499 + $0x18] sm:$0xff] %v494
    %504 = vst [vmem:[%s499 + $0x20] sm:$0xff] %v495
    %505 = vst [vmem:[%s499 + $0x28] sm:$0xff] %v496
    %506 = vst [vmem:[%s499 + $0x30] sm:$0xff] %v497
    %507 = vst [vmem:[%s499 + $0x38] sm:$0xff] %v498
    // Predicated region
    $region18: #{tpu_custom_call.1} parent=1 // pred_check
      _
    $region19: #{tpu_custom_call.1} parent=1 // pred_check_branch
      %509 = sbr.rel (0) target = $region21
    $region20: #{tpu_custom_call.1} parent=1 // pred_region
      %s511 = ssub.s32 2048, 2048
      %512 = vsyncadd [#allocation4], %s511
      %s513 = sshll.u32 [#allocation3], 4
      %s514 = int_to_ptr.vmem [resolvable:$true] %s513
      %519 = dma.vmem_to_hbm [thread:$0]  %s514, 2048, %s4, [#allocation4], 256, 256, 16
    $region21: #{tpu_custom_call.1} parent=1 // pred_fallthru
      _
    // Predicated region
    $region22: #{tpu_custom_call.1} parent=1 // pred_check
      _
    $region23: #{tpu_custom_call.1} parent=1 // pred_check_branch
      %521 = sbr.rel (0) target = $region25
    $region24: #{tpu_custom_call.1} parent=1 // pred_region
      %522 = dma.done [#allocation4], 2048
    $region25: #{tpu_custom_call.1} parent=1 // pred_fallthru
      _
    %523 = vsyncpa [#allocation4], 1

</llo_original>
